<compile_context>
chip_gen: v7x
topology: tpu7x:2x2x1
jax: 0.10.0
libtpu: 0.0.40
codegen_flags: <defaults>
</compile_context>

<pallas_src>
import functools

import jax
import jax.numpy as jnp
from jax import lax
from jax.experimental import pallas as pl
from jax.experimental.pallas import tpu as pltpu

_INV_SQRT2 = 0.7071067811865476


def _gelu_exact(y):
    # Exact erf-based GELU (PyTorch nn.GELU() default).
    # TODO(synk): on v7x this is the VALU-bound hot spot; an EUP-exp-based erf
    # could shave per-element VPU ops if a looser tolerance were acceptable.
    return 0.5 * y * (1.0 + lax.erf(y * _INV_SQRT2))


# ---------------------------------------------------------------------------
# Path 1: the whole (b, c) spatial row is resident in VMEM (common case).
# ---------------------------------------------------------------------------
def _simam_row_kernel(x_ref, o_ref, *, e_lambda: float, hw: int):
    # x_ref / o_ref: (tile_rows, hw) — full-extent spatial axis, no padding.
    x = x_ref[...].astype(jnp.float32)
    n = float(hw - 1)  # hw == 1 -> 0.0 -> inf/nan, same as the PyTorch module

    # Two-pass variance (x already in VMEM): no extra HBM traffic and no
    # catastrophic cancellation, unlike sum(x^2) - sum(x)^2/hw.
    mu = jnp.sum(x, axis=-1, keepdims=True) * (1.0 / float(hw))
    d = x - mu
    d2 = d * d                                  # reused as the numerator below
    s = jnp.sum(d2, axis=-1, keepdims=True)

    # Per-row reciprocal + per-element multiply instead of a per-element divide.
    inv_denom = pl.reciprocal(4.0 * (s / n + e_lambda), approx=False)
    y = d2 * inv_denom + 0.5
    o_ref[...] = (x * _gelu_exact(y)).astype(o_ref.dtype)


# ---------------------------------------------------------------------------
# Path 2: two-phase streaming kernel for large H*W (row does not fit VMEM).
# grid = (row_tiles, 2 phases, hw_tiles); phase 0 accumulates per-row sums,
# phase 1 re-streams x and applies the elementwise transform.
# ---------------------------------------------------------------------------
def _simam_streaming_kernel(x_ref, o_ref, mu_ref, inv_ref, *, e_lambda: float,
                            hw: int, tile_hw: int):
    p = pl.program_id(1)
    k = pl.program_id(2)
    last_k = pl.num_programs(2) - 1

    @pl.when((p == 0) & (k == 0))
    def _init():
        mu_ref[...] = jnp.zeros_like(mu_ref)    # running sum(x)
        inv_ref[...] = jnp.zeros_like(inv_ref)  # running sum(x*x)

    x = x_ref[...].astype(jnp.float32)

    @pl.when(p == 0)
    def _accumulate():
        # Mask lanes past hw on the last (partial) spatial tile so padding
        # never pollutes the sums.
        lane = lax.broadcasted_iota(jnp.int32, x.shape, 1)
        xm = jnp.where(lane < hw - k * tile_hw, x, 0.0)
        mu_ref[...] += jnp.sum(xm, axis=-1, keepdims=True)
        inv_ref[...] += jnp.sum(xm * xm, axis=-1, keepdims=True)

    @pl.when((p == 0) & (k == last_k))
    def _finalize_stats():
        sx = mu_ref[...]
        sx2 = inv_ref[...]
        mu = sx * (1.0 / float(hw))
        # Sum-of-squares identity (streaming path only; mild cancellation risk
        # when |mean| >> std — noted, acceptable for the fallback path).
        s = sx2 - sx * mu
        mu_ref[...] = mu
        inv_ref[...] = pl.reciprocal(4.0 * (s / float(hw - 1) + e_lambda),
                                     approx=False)

    @pl.when(p == 1)
    def _apply():
        d = x - mu_ref[...]
        y = d * d * inv_ref[...] + 0.5
        o_ref[...] = (x * _gelu_exact(y)).astype(o_ref.dtype)


# ---------------------------------------------------------------------------
# Wrapper
# ---------------------------------------------------------------------------
def _round_up(v: int, m: int) -> int:
    return ((v + m - 1) // m) * m


def _vmem_capacity_bytes() -> int:
    try:
        cap = getattr(pltpu.get_tpu_info(), "vmem_capacity_bytes", None)
        if cap:
            return int(cap)
    except Exception:
        pass
    return 64 * 1024 * 1024  # conservative fallback (v7x per-TensorCore VMEM)


def _choose_tile_rows(bc: int, sub: int, cap_rows: int) -> int:
    """Rows per grid step: as large as the VMEM budget allows while keeping
    >= 4 grid steps (>= 2 per v7x TensorCore) when there is enough work,
    preferring an even step count so both cores stay busy."""
    if bc <= sub:
        return bc  # single full-extent block (second-to-last-dim exemption)
    cap = max(sub, (cap_rows // sub) * sub)
    want = 4 if bc >= 4 * sub else 2
    tr = max(sub, min(cap, (bc // want) // sub * sub))

    def steps(t):
        return -(-bc // t)

    if steps(tr) % 2:  # best-effort nudge towards an even grid-step count
        for cand in (tr + sub, tr - sub):
            if sub <= cand <= cap and steps(cand) >= want and steps(cand) % 2 == 0:
                tr = cand
                break
    return tr


def simam(x: jax.Array, e_lambda: float = 1e-4, *,
          _streaming_tile_hw=None) -> jax.Array:
    """SimAM forward. x: (B, C, H, W). Returns same shape/dtype.

    `_streaming_tile_hw` forces the two-phase streaming path with the given
    spatial tile (testing hook only).
    """
    b, c, h, w = x.shape
    hw = h * w
    bc = b * c
    x2 = x.reshape(bc, hw)  # free metadata reshape for contiguous NCHW

    itemsize = jnp.dtype(x.dtype).itemsize
    sub = max(8, 32 // itemsize)        # sublane packing: f32=8, bf16=16, int8=32

    # Generation-aware VMEM budget.
    if _vmem_capacity_bytes() >= 100 * 1024 * 1024:   # v5e / v6e: 128 MiB VMEM
        vmem_limit = 64 * 1024 * 1024
        working = 40 * 1024 * 1024
    else:                                             # v7x: 64 MiB per TensorCore
        vmem_limit = 32 * 1024 * 1024
        working = 20 * 1024 * 1024

    # Per-element footprint: double-buffered in + out (native dtype) plus ~4
    # tile-sized f32 temporaries inside the kernel (x cast, d, d^2, y/act).
    bytes_per_elem = 4 * itemsize + 4 * 4
    row_bytes = hw * bytes_per_elem
    min_rows = bc if bc <= sub else sub

    use_streaming = (_streaming_tile_hw is not None) or (min_rows * row_bytes > working)

    if not use_streaming:
        cap_rows = max(min_rows, working // row_bytes)
        tile_rows = _choose_tile_rows(bc, sub, cap_rows)
        out2 = pl.pallas_call(
            functools.partial(_simam_row_kernel, e_lambda=e_lambda, hw=hw),
            out_shape=jax.ShapeDtypeStruct((bc, hw), x.dtype),
            grid_spec=pltpu.PrefetchScalarGridSpec(
                num_scalar_prefetch=0,
                grid=(pl.cdiv(bc, tile_rows),),
                in_specs=[pl.BlockSpec((tile_rows, hw), lambda i: (i, 0))],
                out_specs=pl.BlockSpec((tile_rows, hw), lambda i: (i, 0)),
            ),
            compiler_params=pltpu.CompilerParams(
                dimension_semantics=("parallel",),
                vmem_limit_bytes=vmem_limit,
            ),
        )(x2)
    else:
        tile_rows = bc if bc <= sub else sub
        if _streaming_tile_hw is not None:
            tile_hw = max(128, _round_up(int(_streaming_tile_hw), 128))
        else:
            tile_hw = max(128, (working // (tile_rows * bytes_per_elem)) // 128 * 128)
            tile_hw = min(tile_hw, _round_up(hw, 128), 64 * 1024)
        grid = (pl.cdiv(bc, tile_rows), 2, pl.cdiv(hw, tile_hw))
        out2 = pl.pallas_call(
            functools.partial(_simam_streaming_kernel, e_lambda=e_lambda,
                              hw=hw, tile_hw=tile_hw),
            out_shape=jax.ShapeDtypeStruct((bc, hw), x.dtype),
            grid_spec=pltpu.PrefetchScalarGridSpec(
                num_scalar_prefetch=0,
                grid=grid,
                in_specs=[pl.BlockSpec((tile_rows, tile_hw),
                                       lambda r, p, k: (r, k))],
                # Phase 0 parks the output index on (r, 0) so no garbage block
                # is ever written back; phase 1 visits (r, k) and stores real
                # data before each writeback.
                out_specs=pl.BlockSpec((tile_rows, tile_hw),
                                       lambda r, p, k: (r, k * p)),
                scratch_shapes=[pltpu.VMEM((tile_rows, 1), jnp.float32),
                                pltpu.VMEM((tile_rows, 1), jnp.float32)],
            ),
            compiler_params=pltpu.CompilerParams(
                dimension_semantics=("parallel", "arbitrary", "arbitrary"),
                vmem_limit_bytes=vmem_limit,
            ),
        )(x2)

    return out2.reshape(b, c, h, w)


def _simam_ref(x: jax.Array, e_lambda: float = 1e-4) -> jax.Array:
    # Pure-JAX reference mirroring the PyTorch forward.
    n = x.shape[2] * x.shape[3] - 1
    mu = jnp.mean(x, axis=(2, 3), keepdims=True)
    d2 = (x - mu) ** 2
    y = d2 / (4.0 * (jnp.sum(d2, axis=(2, 3), keepdims=True) / n + e_lambda)) + 0.5
    return x * jax.nn.gelu(y, approximate=False)


if __name__ == "__main__":
    key = jax.random.PRNGKey(0)
    k1, k2, k3 = jax.random.split(key, 3)

    # Primary: (2, 4, 16, 16) f32 -> single-pass path, one (8, 256) block.
    x = jax.random.normal(k1, (2, 4, 16, 16), dtype=jnp.float32)
    out = jax.block_until_ready(simam(x, e_lambda=1e-4))
    assert out.shape == x.shape and out.dtype == x.dtype
    assert jnp.allclose(out, _simam_ref(x), atol=1e-5, rtol=1e-5), "mismatch (single-pass)"

    # Non-multiple-of-128 spatial size (7*7 = 49) with an uneven row grid
    # (bc = 15, tile_rows = 8): full-extent last dim, no pad/slice passes.
    x2 = jax.random.normal(k2, (3, 5, 7, 7), dtype=jnp.float32)
    out2 = jax.block_until_ready(simam(x2, e_lambda=1e-4))
    assert out2.shape == x2.shape and out2.dtype == x2.dtype
    assert jnp.allclose(out2, _simam_ref(x2), atol=1e-5, rtol=1e-5), "mismatch (uneven rows)"

    # Large-H*W fallback forced onto a small shape: two-phase streaming path
    # with a partial last spatial tile (576 = 4*128 + 64).
    x3 = jax.random.normal(k3, (1, 2, 24, 24), dtype=jnp.float32)
    out3 = jax.block_until_ready(simam(x3, e_lambda=1e-4, _streaming_tile_hw=128))
    assert out3.shape == x3.shape and out3.dtype == x3.dtype
    assert jnp.allclose(out3, _simam_ref(x3), atol=1e-5, rtol=1e-5), "mismatch (streaming)"

    print("KERNEL_OK")
</pallas_src>

<mosaic_0001>
module attributes {stable_mosaic.version = 11 : i64} {
  func.func @_simam_row_kernel(%arg0: i32, %arg1: memref<8x256xf32, #tpu.memory_space<vmem>>, %arg2: memref<8x256xf32, #tpu.memory_space<vmem>>) attributes {dimension_semantics = [#tpu.dimension_semantics<parallel>], iteration_bounds = array<i64: 1>, scalar_prefetch = 0 : i64, scratch_operands = 0 : i64, tpu.core_type = #tpu.core_type<tc>, window_params = [{transform_indices = @transform_0, window_bounds = array<i64: 8, 256>}, {transform_indices = @transform_1, window_bounds = array<i64: 8, 256>}]} {
    %c0 = arith.constant 0 : index
    %c0_0 = arith.constant 0 : index
    %0 = vector.load %arg1[%c0, %c0_0] : memref<8x256xf32, #tpu.memory_space<vmem>>, vector<8x256xf32>
    %cst = arith.constant dense<0.000000e+00> : vector<8xf32>
    %1 = vector.multi_reduction <add>, %0, %cst [1] : vector<8x256xf32> to vector<8xf32>
    %2 = vector.shape_cast %1 : vector<8xf32> to vector<8x1xf32>
    %cst_1 = arith.constant 3.906250e-03 : f32
    %3 = vector.broadcast %cst_1 : f32 to vector<8x1xf32>
    %4 = arith.mulf %2, %3 : vector<8x1xf32>
    %5 = vector.broadcast %4 : vector<8x1xf32> to vector<8x256xf32>
    %6 = arith.subf %0, %5 : vector<8x256xf32>
    %7 = arith.mulf %6, %6 : vector<8x256xf32>
    %cst_2 = arith.constant dense<0.000000e+00> : vector<8xf32>
    %8 = vector.multi_reduction <add>, %7, %cst_2 [1] : vector<8x256xf32> to vector<8xf32>
    %9 = vector.shape_cast %8 : vector<8xf32> to vector<8x1xf32>
    %cst_3 = arith.constant 2.550000e+02 : f32
    %10 = vector.broadcast %cst_3 : f32 to vector<8x1xf32>
    %11 = arith.divf %9, %10 : vector<8x1xf32>
    %cst_4 = arith.constant 9.99999974E-5 : f32
    %12 = vector.broadcast %cst_4 : f32 to vector<8x1xf32>
    %13 = arith.addf %11, %12 : vector<8x1xf32>
    %cst_5 = arith.constant 4.000000e+00 : f32
    %14 = vector.broadcast %cst_5 : f32 to vector<8x1xf32>
    %15 = arith.mulf %14, %13 : vector<8x1xf32>
    %16 = tpu.reciprocal %15 : vector<8x1xf32> -> vector<8x1xf32>
    %17 = vector.broadcast %16 : vector<8x1xf32> to vector<8x256xf32>
    %18 = arith.mulf %7, %17 : vector<8x256xf32>
    %cst_6 = arith.constant 5.000000e-01 : f32
    %19 = vector.broadcast %cst_6 : f32 to vector<8x256xf32>
    %20 = arith.addf %18, %19 : vector<8x256xf32>
    %cst_7 = arith.constant 5.000000e-01 : f32
    %21 = vector.broadcast %cst_7 : f32 to vector<8x256xf32>
    %22 = arith.mulf %21, %20 : vector<8x256xf32>
    %cst_8 = arith.constant 0.707106769 : f32
    %23 = vector.broadcast %cst_8 : f32 to vector<8x256xf32>
    %24 = arith.mulf %20, %23 : vector<8x256xf32>
    %25 = math.erf %24 : vector<8x256xf32>
    %cst_9 = arith.constant 1.000000e+00 : f32
    %26 = vector.broadcast %cst_9 : f32 to vector<8x256xf32>
    %27 = arith.addf %26, %25 : vector<8x256xf32>
    %28 = arith.mulf %22, %27 : vector<8x256xf32>
    %29 = arith.mulf %0, %28 : vector<8x256xf32>
    %c0_10 = arith.constant 0 : index
    %c0_11 = arith.constant 0 : index
    %30 = vector.load %arg2[%c0_10, %c0_11] : memref<8x256xf32, #tpu.memory_space<vmem>>, vector<8x256xf32>
    tpu.vector_store %arg2[%c0_10, %c0_11], %29 {strides = array<i32>} : memref<8x256xf32, #tpu.memory_space<vmem>>, vector<8x256xf32>,
    return
  }
  func.func @transform_0(%arg0: i32) -> (i32, i32) {
    %c0_i32 = arith.constant 0 : i32
    %c0_i32_0 = arith.constant 0 : i32
    return %arg0, %c0_i32 : i32, i32
  }
  func.func @transform_1(%arg0: i32) -> (i32, i32) {
    %c0_i32 = arith.constant 0 : i32
    %c0_i32_0 = arith.constant 0 : i32
    return %arg0, %c0_i32 : i32, i32
  }
}

</mosaic_0001>

<llo_original>
// kernel: tpu_custom_call.1
$region0: #{tpu_custom_call.1}
  #allocation0 [shape = 'u32[]', space=smem, size = 0x4, offset = 0x4, fixed_abs, tag = 'smem constant byte address 0x4 - core index']
  #allocation1 [shape = 'u32[144,128]{1,0:T(1,128)}', space=vmem, size = 0x12000, scoped, tag = 'internal scratch']
  %s0 = inlined_call_operand.hbm [shape: f32[8,256], index: 0, kind: input, shape index: {}]
  %s1 = inlined_call_operand.hbm [shape: f32[8,256], index: 1, kind: output, shape index: {}]
  %s2 = sld [smem:[#allocation0]]
  $region18: #{tpu_custom_call.1} parent=0
    _
  %s4 = ssub.s32 1, %s2
  %s5 = scalar_select 0, %s4, %s2
  $region1: #{tpu_custom_call.1} parent=0
    #allocation2 [shape = 'u8[8192]{0}', space=vmem, size = 0x2000, scoped, tag = 'input window, operand 0, single buffered']
    #allocation3 [shape = 's32[1]{0}', space=sflag, size = 0x4, scoped, tag = 'scoped memory for tpu_custom_call.1']
    #allocation4 [shape = 's32[1]{0}', space=sflag, size = 0x4, scoped, tag = 'scoped memory for tpu_custom_call.1']
    #allocation5 [shape = 'u8[8192]{0}', space=vmem, size = 0x2000, scoped, tag = 'output window, operand 0, single buffered']
    %6 = vsyncpa [#allocation3], 0
    %7 = vsyncpa [#allocation4], 0
    // Predicated region
    $region2: #{tpu_custom_call.1} parent=1 // pred_check
      _
    $region3: #{tpu_custom_call.1} parent=1 // pred_check_branch
      %9 = sbr.rel (0) target = $region5
    $region4: #{tpu_custom_call.1} parent=1 // pred_region
      %s11 = ssub.s32 256, 256
      %12 = vsyncadd [#allocation3], %s11
      %s14 = sshll.u32 [#allocation2], 4
      %s15 = int_to_ptr.vmem [resolvable:$true] %s14
      %17 = dma.hbm_to_vmem [thread:$0]  %s0, 256, %s15, [#allocation3]
    $region5: #{tpu_custom_call.1} parent=1 // pred_fallthru
      _
    // Predicated region
    $region6: #{tpu_custom_call.1} parent=1 // pred_check
      _
    $region7: #{tpu_custom_call.1} parent=1 // pred_check_branch
      %19 = sbr.rel (0) target = $region9
    $region8: #{tpu_custom_call.1} parent=1 // pred_region
      %20 = dma.done [#allocation3], 256
    $region9: #{tpu_custom_call.1} parent=1 // pred_fallthru
      _
    %v21 = vld [vmem:[#allocation2] sm:$0xff]
    %v22 = vld [vmem:[#allocation2 + $0x8] sm:$0xff]
    %v23 = vadd.f32 %v21, %v22
    %24 = vadd.xlane.f32.xlu0 %v23
    %v25 = vpop.xlane.xlu0 %24
    %v26 = vmul.f32 %v25, 0.00390625
    %v27 = vsub.f32 %v21, %v26
    %v28 = vsub.f32 %v22, %v26
    %v29 = vmul.f32 %v27, %v27
    %v30 = vmul.f32 %v28, %v28
    %v31 = vadd.f32 %v29, %v30
    %32 = vadd.xlane.f32.xlu0 %v31
    %v33 = vpop.xlane.xlu0 %32
    %v34 = vrcp.pop 255.0
    %v35 = vmul.f32 %v33, %v34
    %v36 = vadd.f32 %v35, 0.0001
    %v37 = vmul.f32 %v36, 4.0
    %v38 = vrcp.pop %v37
    %v39 = vmul.f32 %v29, %v38
    %v40 = vmul.f32 %v30, %v38
    %v41 = vadd.f32 %v39, 0.5
    %v42 = vadd.f32 %v40, 0.5
    %v43 = vmul.f32 %v41, 0.5
    %v44 = vmul.f32 %v42, 0.5
    %v45 = vmul.f32 %v41, 0.70710677
    %v46 = vmul.f32 %v42, 0.70710677
    %v47 = verf.f32.pop %v45
    %v48 = verf.f32.pop %v46
    %v49 = vadd.f32 %v47, 1.0
    %v50 = vadd.f32 %v48, 1.0
    %v51 = vmul.f32 %v43, %v49
    %v52 = vmul.f32 %v44, %v50
    %v53 = vmul.f32 %v21, %v51
    %v54 = vmul.f32 %v22, %v52
    %55 = vst [vmem:[#allocation5] sm:$0xff] %v53
    %56 = vst [vmem:[#allocation5 + $0x8] sm:$0xff] %v54
    // Predicated region
    $region10: #{tpu_custom_call.1} parent=1 // pred_check
      _
    $region11: #{tpu_custom_call.1} parent=1 // pred_check_branch
      %58 = sbr.rel (0) target = $region13
    $region12: #{tpu_custom_call.1} parent=1 // pred_region
      %s60 = ssub.s32 256, 256
      %61 = vsyncadd [#allocation4], %s60
      %s63 = sshll.u32 [#allocation5], 4
      %s64 = int_to_ptr.vmem [resolvable:$true] %s63
      %66 = dma.vmem_to_hbm [thread:$0]  %s64, 256, %s1, [#allocation4]
    $region13: #{tpu_custom_call.1} parent=1 // pred_fallthru
      _
    // Predicated region
    $region14: #{tpu_custom_call.1} parent=1 // pred_check
      _
    $region15: #{tpu_custom_call.1} parent=1 // pred_check_branch
      %68 = sbr.rel (0) target = $region17
    $region16: #{tpu_custom_call.1} parent=1 // pred_region
      %69 = dma.done [#allocation4], 256
    $region17: #{tpu_custom_call.1} parent=1 // pred_fallthru
      _
    %70 = vsyncpa [#allocation3], 1
    %71 = vsyncpa [#allocation4], 1

</llo_original>
